<compile_context>
chip_gen: v6e
topology: v6e:2x2x1
jax: 0.10.0
libtpu: 0.0.40
codegen_flags: <defaults>
</compile_context>

<pallas_src>
import functools

import jax
import jax.numpy as jnp
from jax.experimental import pallas as pl
from jax.experimental.pallas import tpu as pltpu


def _coupling_kernel(x_ref, w1_ref, b1_ref, w2_ref, b2_ref, y_ref, *, half):
    # x_ref: (TB, dim); weights resident in VMEM across grid steps.
    x = x_ref[...]
    x1 = x[:, :half]
    x2 = x[:, half:]

    # hidden = tanh(x1 @ W1 + b1)   (MXU matmul, EUP tanh)
    h = jnp.tanh(
        jnp.dot(x1, w1_ref[...], preferred_element_type=jnp.float32) + b1_ref[...]
    )
    # y2 = x2 + (h @ W2 + b2)
    y2 = x2 + jnp.dot(h, w2_ref[...], preferred_element_type=jnp.float32) + b2_ref[...]

    # Single lane-dense store of the full (TB, dim) output block.
    y_ref[...] = jnp.concatenate([x1, y2], axis=1)


def nice_coupling_forward(x, w1, b1, w2, b2, *, block_b=256):
    """x: (B, dim) f32. w1: (dim//2, hidden), b1: (1, hidden),
    w2: (hidden, dim//2), b2: (1, dim//2). Returns (B, dim) f32."""
    B, dim = x.shape
    half = dim // 2
    hidden = w1.shape[1]

    # Batch tile: either the whole batch (small B) or a multiple of 8 sublanes.
    if block_b >= B:
        tb = B
    else:
        tb = max(8, (block_b // 8) * 8)

    n_tiles = pl.cdiv(B, tb)
    Bp = n_tiles * tb
    x_in = jnp.pad(x, ((0, Bp - B), (0, 0))) if Bp != B else x

    bytes_accessed = (
        2 * Bp * dim * 4                      # x read + y write
        + (half * hidden + hidden * half) * 4  # weights
        + (hidden + half) * 4                  # biases
    )
    cost = pl.CostEstimate(
        flops=2 * 2 * Bp * half * hidden,      # two matmuls
        transcendentals=Bp * hidden,           # tanh
        bytes_accessed=bytes_accessed,
    )

    grid_spec = pltpu.PrefetchScalarGridSpec(
        num_scalar_prefetch=0,
        grid=(n_tiles,),
        in_specs=[
            pl.BlockSpec((tb, dim), lambda i: (i, 0)),        # x tile
            pl.BlockSpec((half, hidden), lambda i: (0, 0)),   # W1 (resident)
            pl.BlockSpec((1, hidden), lambda i: (0, 0)),      # b1 (resident)
            pl.BlockSpec((hidden, half), lambda i: (0, 0)),   # W2 (resident)
            pl.BlockSpec((1, half), lambda i: (0, 0)),        # b2 (resident)
        ],
        out_specs=pl.BlockSpec((tb, dim), lambda i: (i, 0)),  # y tile
    )

    y = pl.pallas_call(
        functools.partial(_coupling_kernel, half=half),
        out_shape=jax.ShapeDtypeStruct((Bp, dim), jnp.float32),
        grid_spec=grid_spec,
        compiler_params=pltpu.CompilerParams(
            dimension_semantics=("parallel",),
        ),
        cost_estimate=cost,
    )(x_in, w1, b1, w2, b2)

    return y[:B] if Bp != B else y


def _reference_forward(x, w1, b1, w2, b2):
    half = x.shape[1] // 2
    x1, x2 = x[:, :half], x[:, half:]
    h = jnp.tanh(x1 @ w1 + b1)
    y2 = x2 + (h @ w2 + b2)
    return jnp.concatenate([x1, y2], axis=1)


if __name__ == "__main__":
    # Small demo config consistent with NICECouplingLayer(dim=16, hidden_dim=32).
    B, dim, hidden_dim = 64, 16, 32
    half = dim // 2

    key = jax.random.PRNGKey(0)
    kx, kw1, kb1, kw2, kb2 = jax.random.split(key, 5)

    x = jax.random.normal(kx, (B, dim), dtype=jnp.float32)

    # PyTorch Linear stores (out, in); we store the transpose (in, out) so the
    # kernel does x @ W directly — same math.
    w1 = 0.1 * jax.random.normal(kw1, (half, hidden_dim), dtype=jnp.float32)
    b1 = 0.1 * jax.random.normal(kb1, (1, hidden_dim), dtype=jnp.float32)
    w2 = 0.1 * jax.random.normal(kw2, (hidden_dim, half), dtype=jnp.float32)
    b2 = 0.1 * jax.random.normal(kb2, (1, half), dtype=jnp.float32)

    # block_b=32 so the demo actually exercises the batch grid (64/32 = 2 tiles).
    y = nice_coupling_forward(x, w1, b1, w2, b2, block_b=32)
    y = jax.block_until_ready(y)

    y_ref = _reference_forward(x, w1, b1, w2, b2)
    assert y.shape == (B, dim)
    assert jnp.allclose(y, y_ref, atol=1e-5, rtol=1e-5), "mismatch vs reference"

    print("KERNEL_OK")
</pallas_src>

<mosaic_0001>
module attributes {stable_mosaic.version = 11 : i64} {
  func.func @_coupling_kernel(%arg0: i32, %arg1: memref<32x16xf32, #tpu.memory_space<vmem>>, %arg2: memref<8x32xf32, #tpu.memory_space<vmem>>, %arg3: memref<1x32xf32, #tpu.memory_space<vmem>>, %arg4: memref<32x8xf32, #tpu.memory_space<vmem>>, %arg5: memref<1x8xf32, #tpu.memory_space<vmem>>, %arg6: memref<32x16xf32, #tpu.memory_space<vmem>>) attributes {dimension_semantics = [#tpu.dimension_semantics<parallel>], iteration_bounds = array<i64: 2>, scalar_prefetch = 0 : i64, scratch_operands = 0 : i64, tpu.core_type = #tpu.core_type<tc>, window_params = [{transform_indices = @transform_0, window_bounds = array<i64: 32, 16>}, {pipeline_mode = #tpu.pipeline_mode<synchronous>, transform_indices = @transform_1, window_bounds = array<i64: 8, 32>}, {pipeline_mode = #tpu.pipeline_mode<synchronous>, transform_indices = @transform_2, window_bounds = array<i64: 1, 32>}, {pipeline_mode = #tpu.pipeline_mode<synchronous>, transform_indices = @transform_3, window_bounds = array<i64: 32, 8>}, {pipeline_mode = #tpu.pipeline_mode<synchronous>, transform_indices = @transform_4, window_bounds = array<i64: 1, 8>}, {transform_indices = @transform_5, window_bounds = array<i64: 32, 16>}]} {
    %c0 = arith.constant 0 : index
    %c0_0 = arith.constant 0 : index
    %0 = vector.load %arg1[%c0, %c0_0] : memref<32x16xf32, #tpu.memory_space<vmem>>, vector<32x16xf32>
    %1 = vector.extract_strided_slice %0 {offsets = [0, 0], sizes = [32, 8], strides = [1, 1]} : vector<32x16xf32> to vector<32x8xf32>
    %2 = vector.extract_strided_slice %0 {offsets = [0, 8], sizes = [32, 8], strides = [1, 1]} : vector<32x16xf32> to vector<32x8xf32>
    %c0_1 = arith.constant 0 : index
    %c0_2 = arith.constant 0 : index
    %3 = vector.load %arg2[%c0_1, %c0_2] : memref<8x32xf32, #tpu.memory_space<vmem>>, vector<8x32xf32>
    %cst = arith.constant dense<0.000000e+00> : vector<32x32xf32>
    %4 = tpu.matmul %1, %3, %cst {dimension_numbers = #tpu.dot_dimension_numbers<[1], [0], [0], [1], [0, 0, 1, 1], [], []>} : vector<32x8xf32>, vector<8x32xf32>, vector<32x32xf32> -> vector<32x32xf32>
    %c0_3 = arith.constant 0 : index
    %c0_4 = arith.constant 0 : index
    %5 = vector.load %arg3[%c0_3, %c0_4] : memref<1x32xf32, #tpu.memory_space<vmem>>, vector<1x32xf32>
    %6 = vector.broadcast %5 : vector<1x32xf32> to vector<32x32xf32>
    %7 = arith.addf %4, %6 : vector<32x32xf32>
    %8 = math.tanh %7 : vector<32x32xf32>
    %c0_5 = arith.constant 0 : index
    %c0_6 = arith.constant 0 : index
    %9 = vector.load %arg4[%c0_5, %c0_6] : memref<32x8xf32, #tpu.memory_space<vmem>>, vector<32x8xf32>
    %cst_7 = arith.constant dense<0.000000e+00> : vector<32x8xf32>
    %10 = tpu.matmul %8, %9, %cst_7 {dimension_numbers = #tpu.dot_dimension_numbers<[1], [0], [0], [1], [0, 0, 1, 1], [], []>} : vector<32x32xf32>, vector<32x8xf32>, vector<32x8xf32> -> vector<32x8xf32>
    %11 = arith.addf %2, %10 : vector<32x8xf32>
    %c0_8 = arith.constant 0 : index
    %c0_9 = arith.constant 0 : index
    %12 = vector.load %arg5[%c0_8, %c0_9] : memref<1x8xf32, #tpu.memory_space<vmem>>, vector<1x8xf32>
    %13 = vector.broadcast %12 : vector<1x8xf32> to vector<32x8xf32>
    %14 = arith.addf %11, %13 : vector<32x8xf32>
    %15 = tpu.concatenate %1, %14 in 1 : vector<32x8xf32>, vector<32x8xf32> -> vector<32x16xf32>
    %c0_10 = arith.constant 0 : index
    %c0_11 = arith.constant 0 : index
    %16 = vector.load %arg6[%c0_10, %c0_11] : memref<32x16xf32, #tpu.memory_space<vmem>>, vector<32x16xf32>
    tpu.vector_store %arg6[%c0_10, %c0_11], %15 {strides = array<i32>} : memref<32x16xf32, #tpu.memory_space<vmem>>, vector<32x16xf32>,
    return
  }
  func.func @transform_0(%arg0: i32) -> (i32, i32) {
    %c0_i32 = arith.constant 0 : i32
    %c0_i32_0 = arith.constant 0 : i32
    return %arg0, %c0_i32 : i32, i32
  }
  func.func @transform_1(%arg0: i32) -> (i32, i32) {
    %c0_i32 = arith.constant 0 : i32
    %c0_i32_0 = arith.constant 0 : i32
    %c0_i32_1 = arith.constant 0 : i32
    return %c0_i32, %c0_i32_0 : i32, i32
  }
  func.func @transform_2(%arg0: i32) -> (i32, i32) {
    %c0_i32 = arith.constant 0 : i32
    %c0_i32_0 = arith.constant 0 : i32
    %c0_i32_1 = arith.constant 0 : i32
    return %c0_i32, %c0_i32_0 : i32, i32
  }
  func.func @transform_3(%arg0: i32) -> (i32, i32) {
    %c0_i32 = arith.constant 0 : i32
    %c0_i32_0 = arith.constant 0 : i32
    %c0_i32_1 = arith.constant 0 : i32
    return %c0_i32, %c0_i32_0 : i32, i32
  }
  func.func @transform_4(%arg0: i32) -> (i32, i32) {
    %c0_i32 = arith.constant 0 : i32
    %c0_i32_0 = arith.constant 0 : i32
    %c0_i32_1 = arith.constant 0 : i32
    return %c0_i32, %c0_i32_0 : i32, i32
  }
  func.func @transform_5(%arg0: i32) -> (i32, i32) {
    %c0_i32 = arith.constant 0 : i32
    %c0_i32_0 = arith.constant 0 : i32
    return %arg0, %c0_i32 : i32, i32
  }
}

</mosaic_0001>

<llo_original>
// kernel: tpu_custom_call.1
$region0: #{tpu_custom_call.1}
  #allocation0 [shape = 'u32[]', space=smem, size = 0x4, offset = 0x4, fixed_abs, tag = 'smem constant byte address 0x4 - core index']
  #allocation1 [shape = 'u32[144,128]{1,0:T(1,128)}', space=vmem, size = 0x12000, scoped, tag = 'internal scratch']
  %s0 = inlined_call_operand.vmem [shape: f32[64,16], index: 0, kind: input, shape index: {}]
  %s1 = inlined_call_operand.vmem [shape: f32[8,32], index: 1, kind: input, shape index: {}]
  %s2 = inlined_call_operand.vmem [shape: f32[1,32], index: 2, kind: input, shape index: {}]
  %s3 = inlined_call_operand.vmem [shape: f32[32,8], index: 3, kind: input, shape index: {}]
  %s4 = inlined_call_operand.vmem [shape: f32[1,8], index: 4, kind: input, shape index: {}]
  %s5 = inlined_call_operand.vmem [shape: f32[64,16], index: 5, kind: output, shape index: {}]
  %s6 = sld [smem:[#allocation0]]
  $region53: #{tpu_custom_call.1} parent=0
    _
  %s8 = ssub.s32 1, %s6
  %s9 = scalar_select 0, %s8, %s6
  loop: start=0, step=1, limit=4
  $region2: #{tpu_custom_call.1} parent=0 // loop_pre_header
    _
  $region3: #{tpu_custom_call.1} parent=0 // loop_header
    %s11 = sphi 0, %s15
    %p12 = scmp.ge.s32.totalorder %s11, 4
    %s21 = sphi 0, %s23
    %s24 = sphi 0, %s21
    %s25 = sphi 0, %s24
    %s41 = sphi 0, %s25
    %s45 = sphi 0, %s45
    %s47 = sphi 0, %s45
    %s48 = sphi 0, %s47
    %s62 = sphi 0, %s48
    %s66 = sphi 0, %s66
    %s68 = sphi 0, %s66
    %s69 = sphi 0, %s68
    %s83 = sphi 0, %s69
    %s87 = sphi 0, %s87
    %s89 = sphi 0, %s87
    %s90 = sphi 0, %s89
    %s104 = sphi 0, %s90
    %s108 = sphi 0, %s108
    %s110 = sphi 0, %s108
    %s111 = sphi 0, %s110
    %s125 = sphi 0, %s111
    %s131 = sphi 0, %s133
    %s134 = sphi 0, %s131
    %s135 = sphi 0, %s134
    %s151 = sphi 0, %s135
  $region4: #{tpu_custom_call.1} parent=0 // loop_header_branch
    %14 = sbr.rel (%p12) target = $region8
  $region5: #{tpu_custom_call.1} parent=0 // loop_body
    %s16 = ssub.s32 %s11, 1
    %s17 = ssub.s32 %s11, 2
    %s18 = sadd.s32 %s11, 1
    %s19 = ssub.s32 %s11, %s18
    %p20 = scmp.eq.s32.totalorder %s19, 0
    %s22 = sadd.s32 %s21, 1
    %s23 = scalar_select %p20, %s21, %s22
    %p26 = pneg %p20
    %p27 = scmp.eq.s32.totalorder %s11, 1
    %p28 = por %p26, %p27
    %p29 = scmp.ne.s32.totalorder %s21, %s24
    %p30 = scmp.eq.s32.totalorder %s11, 0
    %p31 = por %p29, %p30
    %p32 = scmp.ne.s32.totalorder %s21, %s24
    %p33 = scmp.eq.s32.totalorder %s16, 1
    %p34 = por %p32, %p33
    %p35 = scmp.ne.s32.totalorder %s24, %s25
    %p36 = scmp.eq.s32.totalorder %s16, 0
    %p37 = por %p35, %p36
    %p38 = scmp.ne.s32.totalorder %s24, %s25
    %p39 = scmp.eq.s32.totalorder %s17, 1
    %p40 = por %p38, %p39
    %p42 = scmp.ne.s32.totalorder %s25, %s41
    %p43 = scmp.eq.s32.totalorder %s17, 0
    %p44 = por %p42, %p43
    %s46 = sadd.s32 %s45, 1
    %p49 = scmp.eq.s32.totalorder %s11, 1
    %p50 = scmp.ne.s32.totalorder %s45, %s47
    %p51 = scmp.eq.s32.totalorder %s11, 0
    %p52 = por %p50, %p51
    %p53 = scmp.ne.s32.totalorder %s45, %s47
    %p54 = scmp.eq.s32.totalorder %s16, 1
    %p55 = por %p53, %p54
    %p56 = scmp.ne.s32.totalorder %s47, %s48
    %p57 = scmp.eq.s32.totalorder %s16, 0
    %p58 = por %p56, %p57
    %p59 = scmp.ne.s32.totalorder %s47, %s48
    %p60 = scmp.eq.s32.totalorder %s17, 1
    %p61 = por %p59, %p60
    %p63 = scmp.ne.s32.totalorder %s48, %s62
    %p64 = scmp.eq.s32.totalorder %s17, 0
    %p65 = por %p63, %p64
    %s67 = sadd.s32 %s66, 1
    %p70 = scmp.eq.s32.totalorder %s11, 1
    %p71 = scmp.ne.s32.totalorder %s66, %s68
    %p72 = scmp.eq.s32.totalorder %s11, 0
    %p73 = por %p71, %p72
    %p74 = scmp.ne.s32.totalorder %s66, %s68
    %p75 = scmp.eq.s32.totalorder %s16, 1
    %p76 = por %p74, %p75
    %p77 = scmp.ne.s32.totalorder %s68, %s69
    %p78 = scmp.eq.s32.totalorder %s16, 0
    %p79 = por %p77, %p78
    %p80 = scmp.ne.s32.totalorder %s68, %s69
    %p81 = scmp.eq.s32.totalorder %s17, 1
    %p82 = por %p80, %p81
    %p84 = scmp.ne.s32.totalorder %s69, %s83
    %p85 = scmp.eq.s32.totalorder %s17, 0
    %p86 = por %p84, %p85
    %s88 = sadd.s32 %s87, 1
    %p91 = scmp.eq.s32.totalorder %s11, 1
    %p92 = scmp.ne.s32.totalorder %s87, %s89
    %p93 = scmp.eq.s32.totalorder %s11, 0
    %p94 = por %p92, %p93
    %p95 = scmp.ne.s32.totalorder %s87, %s89
    %p96 = scmp.eq.s32.totalorder %s16, 1
    %p97 = por %p95, %p96
    %p98 = scmp.ne.s32.totalorder %s89, %s90
    %p99 = scmp.eq.s32.totalorder %s16, 0
    %p100 = por %p98, %p99
    %p101 = scmp.ne.s32.totalorder %s89, %s90
    %p102 = scmp.eq.s32.totalorder %s17, 1
    %p103 = por %p101, %p102
    %p105 = scmp.ne.s32.totalorder %s90, %s104
    %p106 = scmp.eq.s32.totalorder %s17, 0
    %p107 = por %p105, %p106
    %s109 = sadd.s32 %s108, 1
    %p112 = scmp.eq.s32.totalorder %s11, 1
    %p113 = scmp.ne.s32.totalorder %s108, %s110
    %p114 = scmp.eq.s32.totalorder %s11, 0
    %p115 = por %p113, %p114
    %p116 = scmp.ne.s32.totalorder %s108, %s110
    %p117 = scmp.eq.s32.totalorder %s16, 1
    %p118 = por %p116, %p117
    %p119 = scmp.ne.s32.totalorder %s110, %s111
    %p120 = scmp.eq.s32.totalorder %s16, 0
    %p121 = por %p119, %p120
    %p122 = scmp.ne.s32.totalorder %s110, %s111
    %p123 = scmp.eq.s32.totalorder %s17, 1
    %p124 = por %p122, %p123
    %p126 = scmp.ne.s32.totalorder %s111, %s125
    %p127 = scmp.eq.s32.totalorder %s17, 0
    %p128 = por %p126, %p127
    %s129 = ssub.s32 %s11, %s18
    %p130 = scmp.eq.s32.totalorder %s129, 0
    %s132 = sadd.s32 %s131, 1
    %s133 = scalar_select %p130, %s131, %s132
    %p136 = pneg %p130
    %p137 = scmp.eq.s32.totalorder %s11, 1
    %p138 = por %p136, %p137
    %p139 = scmp.ne.s32.totalorder %s131, %s134
    %p140 = scmp.eq.s32.totalorder %s11, 0
    %p141 = por %p139, %p140
    %p142 = scmp.ne.s32.totalorder %s131, %s134
    %p143 = scmp.eq.s32.totalorder %s16, 1
    %p144 = por %p142, %p143
    %p145 = scmp.ne.s32.totalorder %s134, %s135
    %p146 = scmp.eq.s32.totalorder %s16, 0
    %p147 = por %p145, %p146
    %p148 = scmp.ne.s32.totalorder %s134, %s135
    %p149 = scmp.eq.s32.totalorder %s17, 1
    %p150 = por %p148, %p149
    %p152 = scmp.ne.s32.totalorder %s135, %s151
    %p153 = scmp.eq.s32.totalorder %s17, 0
    %p154 = por %p152, %p153
    %p155 = scmp.le.s32.totalorder 1, %s11
    %p156 = scmp.lt.s32.totalorder %s11, 3
    %p157 = pnand %p155, %p156
    %p158 = pneg %p157
    // Predicated region
    $region9: #{tpu_custom_call.1} parent=5 // pred_check
      _
    $region10: #{tpu_custom_call.1} parent=5 // pred_check_branch
      %160 = sbr.rel (%p157) target = $region12
    $region11: #{tpu_custom_call.1} parent=5 // pred_region
      %s161 = ssub.s32 %s11, 1
      // Predicated region
      $region13: #{tpu_custom_call.1} parent=11 // pred_check
        %p162 = pneg %p58
      $region14: #{tpu_custom_call.1} parent=11 // pred_check_branch
        %164 = sbr.rel (%p162) target = $region16
      $region15: #{tpu_custom_call.1} parent=11 // pred_region
        _
      $region16: #{tpu_custom_call.1} parent=11 // pred_fallthru
        _
      // Predicated region
      $region17: #{tpu_custom_call.1} parent=11 // pred_check
        %p165 = pneg %p79
      $region18: #{tpu_custom_call.1} parent=11 // pred_check_branch
        %167 = sbr.rel (%p165) target = $region20
      $region19: #{tpu_custom_call.1} parent=11 // pred_region
        _
      $region20: #{tpu_custom_call.1} parent=11 // pred_fallthru
        _
      // Predicated region
      $region21: #{tpu_custom_call.1} parent=11 // pred_check
        %p168 = pneg %p100
      $region22: #{tpu_custom_call.1} parent=11 // pred_check_branch
        %170 = sbr.rel (%p168) target = $region24
      $region23: #{tpu_custom_call.1} parent=11 // pred_region
        _
      $region24: #{tpu_custom_call.1} parent=11 // pred_fallthru
        _
      // Predicated region
      $region25: #{tpu_custom_call.1} parent=11 // pred_check
        %p171 = pneg %p121
      $region26: #{tpu_custom_call.1} parent=11 // pred_check_branch
        %173 = sbr.rel (%p171) target = $region28
      $region27: #{tpu_custom_call.1} parent=11 // pred_region
        _
      $region28: #{tpu_custom_call.1} parent=11 // pred_fallthru
        _
    $region12: #{tpu_custom_call.1} parent=5 // pred_fallthru
      _
    %p174 = scmp.lt.s32.totalorder %s11, 2
    // Predicated region
    $region29: #{tpu_custom_call.1} parent=5 // pred_check
      %p175 = pneg %p174
    $region30: #{tpu_custom_call.1} parent=5 // pred_check_branch
      %177 = sbr.rel (%p175) target = $region32
    $region31: #{tpu_custom_call.1} parent=5 // pred_region
      // Predicated region
      $region33: #{tpu_custom_call.1} parent=31 // pred_check
        %p178 = pneg %p31
      $region34: #{tpu_custom_call.1} parent=31 // pred_check_branch
        %180 = sbr.rel (%p178) target = $region36
      $region35: #{tpu_custom_call.1} parent=31 // pred_region
        %s181 = smul.u32 4, %s11
        %p182 = scmp.lt.s32.totalorder %s181, 7
        %s183 = scalar_select %p182, %s181, 7
        %s184 = smul.addr %s183, 8
        %s185 = scalar_lea.vmem %s0, %s184
        %s186 = smul.u32 4, %s11
      $region36: #{tpu_custom_call.1} parent=31 // pred_fallthru
        _
    $region32: #{tpu_custom_call.1} parent=5 // pred_fallthru
      _
    %p187 = scmp.le.s32.totalorder 1, %s11
    %p188 = scmp.lt.s32.totalorder %s11, 3
    %p189 = pnand %p187, %p188
    %p190 = pneg %p189
    // Predicated region
    $region37: #{tpu_custom_call.1} parent=5 // pred_check
      _
    $region38: #{tpu_custom_call.1} parent=5 // pred_check_branch
      %192 = sbr.rel (%p189) target = $region40
    $region39: #{tpu_custom_call.1} parent=5 // pred_region
      %s193 = ssub.s32 %s11, 1
      %s194 = smul.u32 4, %s16
      %p195 = scmp.lt.s32.totalorder %s194, 7
      %s196 = scalar_select %p195, %s194, 7
      %s197 = smul.addr %s196, 8
      %s198 = scalar_lea.vmem %s0, %s197
      %p199 = pneg %p37
      %p200 = pneg %p34
      %p201 = pneg %p58
      %p202 = pneg %p55
      %p203 = pneg %p79
      %p204 = pneg %p76
      %p205 = pneg %p100
      %p206 = pneg %p97
      %p207 = pneg %p121
      %p208 = pneg %p118
      %p209 = pneg %p147
      %p210 = pneg %p144
      %s211 = smul.u32 4, %s16
      %p212 = scmp.lt.s32.totalorder %s211, 7
      %s213 = scalar_select %p212, %s211, 7
      %s214 = smul.addr %s213, 8
      %s215 = scalar_lea.vmem %s5, %s214
      %s216 = smul.u32 4, %s16
      %p217 = scmp.lt.s32.totalorder %s216, 7
      %s218 = scalar_select %p217, %s216, 7
      %s219 = smul.addr %s218, 8
      %s220 = scalar_lea.vmem %s0, %s219
      %s221 = smul.u32 4, %s16
      %s222 = smul.u32 4, %s16
      %p223 = scmp.lt.s32.totalorder %s222, 7
      %s224 = scalar_select %p223, %s222, 7
      %s225 = smul.addr %s224, 8
      %s226 = scalar_lea.vmem %s5, %s225
      %s227 = smul.u32 4, %s16
      %v228 = vld [vmem:[%s220] sm:$0xff]
      %v229 = vld [vmem:[%s220 + $0x8] sm:$0xff]
      %v230 = vld [vmem:[%s220 + $0x10] sm:$0xff]
      %v231 = vld [vmem:[%s220 + $0x18] sm:$0xff]
      %v232 = vld [vmem:[%s1] sm:$0xff]
      %v233 = vld [vmem:[%s2] sm:$0x1]
      %v235 = vlaneseq
      %v236 = vshrl.u32 %v235, 7
      %v237 = vsub.s32 0, %v236
      %v238 = vrot.slane %v233, %v237
      %vm240 = vcmask 64512
      %v242 = vsel %vm240, %v228, 0
      %v245 = vsel %vm240, %v229, 0
      %v248 = vsel %vm240, %v230, 0
      %v251 = vsel %vm240, %v231, 0
      %253 = vmatprep.subr.mxu0 0.0
      %254 = vmatpush1.msra.mxu0 0.0
      %255 = vmatprep.subr.mxu0 0.0
      %256 = vmatpush1.msra.mxu0 0.0
      %257 = vmatprep.subr.mxu0 0.0
      %258 = vmatpush1.msra.mxu0 0.0
      %259 = vmatprep.subr.mxu0 0.0
      %260 = vmatpush1.msra.mxu0 0.0
      %261 = vmatprep.subr.mxu0 0.0
      %262 = vmatpush1.msra.mxu0 0.0
      %263 = vmatprep.subr.mxu0 0.0
      %264 = vmatpush1.msra.mxu0 0.0
      %265 = vmatprep.subr.mxu0 0.0
      %266 = vmatpush1.msra.mxu0 0.0
      %267 = vmatprep.subr.mxu0 0.0
      %268 = vmatpush1.msra.mxu0 0.0
      %269 = vmatprep.subr.mxu0 0.0
      %270 = vmatpush1.msra.mxu0 0.0
      %271 = vmatprep.subr.mxu0 0.0
      %272 = vmatpush1.msra.mxu0 0.0
      %273 = vmatprep.subr.mxu0 0.0
      %274 = vmatpush1.msra.mxu0 0.0
      %275 = vmatprep.subr.mxu0 0.0
      %276 = vmatpush1.msra.mxu0 0.0
      %277 = vmatprep.subr.mxu0 0.0
      %278 = vmatpush1.msra.mxu0 0.0
      %279 = vmatprep.subr.mxu0 0.0
      %280 = vmatpush1.msra.mxu0 0.0
      %281 = vmatprep.subr.mxu0 0.0
      %282 = vmatpush1.msra.mxu0 0.0
      %283 = vmatprep.subr.mxu0 0.0
      %284 = vmatpush1.msra.mxu0 %v232
      %285 = vmatprep.subr.mxu0 0.0
      %286 = vmatpush2.msra.mxu0 0.0
      %287 = vmatprep.subr.mxu0 0.0
      %288 = vmatpush2.msra.mxu0 0.0
      %289 = vmatprep.subr.mxu0 0.0
      %290 = vmatpush2.msra.mxu0 0.0
      %291 = vmatprep.subr.mxu0 0.0
      %292 = vmatpush2.msra.mxu0 0.0
      %293 = vmatprep.subr.mxu0 0.0
      %294 = vmatpush2.msra.mxu0 0.0
      %295 = vmatprep.subr.mxu0 0.0
      %296 = vmatpush2.msra.mxu0 0.0
      %297 = vmatprep.subr.mxu0 0.0
      %298 = vmatpush2.msra.mxu0 0.0
      %299 = vmatprep.subr.mxu0 0.0
      %300 = vmatpush2.msra.mxu0 0.0
      %301 = vmatprep.subr.mxu0 0.0
      %302 = vmatpush2.msra.mxu0 0.0
      %303 = vmatprep.subr.mxu0 0.0
      %304 = vmatpush2.msra.mxu0 0.0
      %305 = vmatprep.subr.mxu0 0.0
      %306 = vmatpush2.msra.mxu0 0.0
      %307 = vmatprep.subr.mxu0 0.0
      %308 = vmatpush2.msra.mxu0 0.0
      %309 = vmatprep.subr.mxu0 0.0
      %310 = vmatpush2.msra.mxu0 0.0
      %311 = vmatprep.subr.mxu0 0.0
      %312 = vmatpush2.msra.mxu0 0.0
      %313 = vmatprep.subr.mxu0 0.0
      %314 = vmatpush2.msra.mxu0 0.0
      %315 = vmatprep.subr.mxu0 0.0
      %316 = vmatpush2.msra.mxu0 0.0
      %317 = vmatprep.mubr.f32.mxu0 0.0
      %318 = vmatmul.mubr.f32.gmra.mxu0 %v242
      %v319 = vpop.f32.mrf.mxu0
      %v320 = vadd.f32 %v238, %v319
      %v321 = vpop.f32.mrf.mxu0
      %322 = vmatprep.mubr.f32.mxu0 0.0
      %323 = vmatmul.mubr.f32.gmra.mxu0 %v245
      %v324 = vpop.f32.mrf.mxu0
      %v325 = vadd.f32 %v238, %v324
      %v326 = vpop.f32.mrf.mxu0
      %327 = vmatprep.mubr.f32.mxu0 0.0
      %328 = vmatmul.mubr.f32.gmra.mxu0 %v248
      %v329 = vpop.f32.mrf.mxu0
      %v330 = vadd.f32 %v238, %v329
      %v331 = vpop.f32.mrf.mxu0
      %332 = vmatprep.mubr.f32.mxu0 0.0
      %333 = vmatmul.mubr.f32.gmra.mxu0 %v251
      %v334 = vpop.f32.mrf.mxu0
      %v335 = vadd.f32 %v238, %v334
      %v336 = vpop.f32.mrf.mxu0
      %337 = vdwg.mxu0
      %v338 = vtanh.pop %v320
      %v339 = vtanh.pop %v325
      %v340 = vtanh.pop %v330
      %v341 = vtanh.pop %v335
      %v342 = vld [vmem:[%s3] sm:$0xff]
      %v343 = vld [vmem:[%s3 + $0x8] sm:$0xff]
      %v344 = vld [vmem:[%s3 + $0x10] sm:$0xff]
      %v345 = vld [vmem:[%s3 + $0x18] sm:$0xff]
      %vm346 = vcmask 261120
      %v348 = vsel %vm346, %v338, 0
      %v351 = vsel %vm346, %v339, 0
      %v354 = vsel %vm346, %v340, 0
      %v357 = vsel %vm346, %v341, 0
      %359 = vmatprep.subr.mxu0 0.0
      %360 = vmatpush1.msra.mxu0 0.0
      %361 = vmatprep.subr.mxu0 0.0
      %362 = vmatpush1.msra.mxu0 0.0
      %363 = vmatprep.subr.mxu0 0.0
      %364 = vmatpush1.msra.mxu0 0.0
      %365 = vmatprep.subr.mxu0 0.0
      %366 = vmatpush1.msra.mxu0 0.0
      %367 = vmatprep.subr.mxu0 0.0
      %368 = vmatpush1.msra.mxu0 0.0
      %369 = vmatprep.subr.mxu0 0.0
      %370 = vmatpush1.msra.mxu0 0.0
      %371 = vmatprep.subr.mxu0 0.0
      %372 = vmatpush1.msra.mxu0 0.0
      %373 = vmatprep.subr.mxu0 0.0
      %374 = vmatpush1.msra.mxu0 0.0
      %375 = vmatprep.subr.mxu0 0.0
      %376 = vmatpush1.msra.mxu0 0.0
      %377 = vmatprep.subr.mxu0 0.0
      %378 = vmatpush1.msra.mxu0 0.0
      %379 = vmatprep.subr.mxu0 0.0
      %380 = vmatpush1.msra.mxu0 0.0
      %381 = vmatprep.subr.mxu0 0.0
      %382 = vmatpush1.msra.mxu0 0.0
      %383 = vmatprep.subr.mxu0 0.0
      %384 = vmatpush1.msra.mxu0 %v345
      %385 = vmatprep.subr.mxu0 0.0
      %386 = vmatpush1.msra.mxu0 %v344
      %387 = vmatprep.subr.mxu0 0.0
      %388 = vmatpush1.msra.mxu0 %v343
      %389 = vmatprep.subr.mxu0 0.0
      %390 = vmatpush1.msra.mxu0 %v342
      %391 = vmatprep.subr.mxu0 0.0
      %392 = vmatpush2.msra.mxu0 0.0
      %393 = vmatprep.subr.mxu0 0.0
      %394 = vmatpush2.msra.mxu0 0.0
      %395 = vmatprep.subr.mxu0 0.0
      %396 = vmatpush2.msra.mxu0 0.0
      %397 = vmatprep.subr.mxu0 0.0
      %398 = vmatpush2.msra.mxu0 0.0
      %399 = vmatprep.subr.mxu0 0.0
      %400 = vmatpush2.msra.mxu0 0.0
      %401 = vmatprep.subr.mxu0 0.0
      %402 = vmatpush2.msra.mxu0 0.0
      %403 = vmatprep.subr.mxu0 0.0
      %404 = vmatpush2.msra.mxu0 0.0
      %405 = vmatprep.subr.mxu0 0.0
      %406 = vmatpush2.msra.mxu0 0.0
      %407 = vmatprep.subr.mxu0 0.0
      %408 = vmatpush2.msra.mxu0 0.0
      %409 = vmatprep.subr.mxu0 0.0
      %410 = vmatpush2.msra.mxu0 0.0
      %411 = vmatprep.subr.mxu0 0.0
      %412 = vmatpush2.msra.mxu0 0.0
      %413 = vmatprep.subr.mxu0 0.0
      %414 = vmatpush2.msra.mxu0 0.0
      %415 = vmatprep.subr.mxu0 0.0
      %416 = vmatpush2.msra.mxu0 0.0
      %417 = vmatprep.subr.mxu0 0.0
      %418 = vmatpush2.msra.mxu0 0.0
      %419 = vmatprep.subr.mxu0 0.0
      %420 = vmatpush2.msra.mxu0 0.0
      %421 = vmatprep.subr.mxu0 0.0
      %422 = vmatpush2.msra.mxu0 0.0
      %423 = vmatprep.mubr.f32.mxu0 0.0
      %424 = vmatmul.mubr.f32.gmra.mxu0 %v348
      %v425 = vpop.f32.mrf.mxu0
      %v426 = vadd.f32 0.0, %v425
      %v427 = vpop.f32.mrf.mxu0
      %428 = vmatprep.mubr.f32.mxu0 0.0
      %429 = vmatmul.mubr.f32.gmra.mxu0 %v351
      %v430 = vpop.f32.mrf.mxu0
      %v431 = vadd.f32 0.0, %v430
      %v432 = vpop.f32.mrf.mxu0
      %433 = vmatprep.mubr.f32.mxu0 0.0
      %434 = vmatmul.mubr.f32.gmra.mxu0 %v354
      %v435 = vpop.f32.mrf.mxu0
      %v436 = vadd.f32 0.0, %v435
      %v437 = vpop.f32.mrf.mxu0
      %438 = vmatprep.mubr.f32.mxu0 0.0
      %439 = vmatmul.mubr.f32.gmra.mxu0 %v357
      %v440 = vpop.f32.mrf.mxu0
      %v441 = vadd.f32 0.0, %v440
      %v442 = vpop.f32.mrf.mxu0
      %443 = vdwg.mxu0
      %448 = vrot.lane.b32.xlu0 %v426, 8
      %v449 = vpop.permute.xlu0 %448
      %450 = vrot.lane.b32.xlu0 %v431, 8
      %v451 = vpop.permute.xlu0 %450
      %452 = vrot.lane.b32.xlu0 %v436, 8
      %v453 = vpop.permute.xlu0 %452
      %454 = vrot.lane.b32.xlu0 %v441, 8
      %v455 = vpop.permute.xlu0 %454
      %v460 = vadd.f32 %v228, %v449
      %v461 = vadd.f32 %v229, %v451
      %v462 = vadd.f32 %v230, %v453
      %v463 = vadd.f32 %v231, %v455
      %v464 = vld [vmem:[%s4] sm:$0x1]
      %v466 = vlaneseq
      %v467 = vshrl.u32 %v466, 7
      %v468 = vsub.s32 0, %v467
      %v469 = vrot.slane %v464, %v468
      %470 = vrot.lane.b32.xlu0 %v469, 8
      %v471 = vpop.permute.xlu0 %470
      %v473 = vadd.f32 %v460, %v471
      %v474 = vadd.f32 %v461, %v471
      %v475 = vadd.f32 %v462, %v471
      %v476 = vadd.f32 %v463, %v471
      %v477 = vsel %vm240, %v228, %v473
      %v478 = vsel %vm240, %v229, %v474
      %v479 = vsel %vm240, %v230, %v475
      %v480 = vsel %vm240, %v231, %v476
      %vm481 = vcmask 130048
      %482 = vst.msk [vmem:[%s226] sm:$0xff] %vm481, %v477
      %483 = vst.msk [vmem:[%s226 + $0x8] sm:$0xff] %vm481, %v478
      %484 = vst.msk [vmem:[%s226 + $0x10] sm:$0xff] %vm481, %v479
      %485 = vst.msk [vmem:[%s226 + $0x18] sm:$0xff] %vm481, %v480
      %s486 = smul.u32 4, %s16
      %p487 = scmp.lt.s32.totalorder %s486, 7
      %s488 = scalar_select %p487, %s486, 7
      %s489 = smul.addr %s488, 8
      %s490 = scalar_lea.vmem %s5, %s489
      // Predicated region
      $region41: #{tpu_custom_call.1} parent=39 // pred_check
        %p491 = pneg %p144
      $region42: #{tpu_custom_call.1} parent=39 // pred_check_branch
        %493 = sbr.rel (%p491) target = $region44
      $region43: #{tpu_custom_call.1} parent=39 // pred_region
        %s494 = smul.u32 4, %s16
      $region44: #{tpu_custom_call.1} parent=39 // pred_fallthru
        _
    $region40: #{tpu_custom_call.1} parent=5 // pred_fallthru
      _
    %p495 = scmp.le.s32.totalorder 2, %s11
    // Predicated region
    $region45: #{tpu_custom_call.1} parent=5 // pred_check
      %p496 = pneg %p495
    $region46: #{tpu_custom_call.1} parent=5 // pred_check_branch
      %498 = sbr.rel (%p496) target = $region48
    $region47: #{tpu_custom_call.1} parent=5 // pred_region
      %s499 = ssub.s32 %s11, 2
      // Predicated region
      $region49: #{tpu_custom_call.1} parent=47 // pred_check
        %p500 = pneg %p150
      $region50: #{tpu_custom_call.1} parent=47 // pred_check_branch
        %502 = sbr.rel (%p500) target = $region52
      $region51: #{tpu_custom_call.1} parent=47 // pred_region
        %s503 = smul.u32 4, %s17
        %p504 = scmp.lt.s32.totalorder %s503, 7
        %s505 = scalar_select %p504, %s503, 7
        %s506 = smul.addr %s505, 8
        %s507 = scalar_lea.vmem %s5, %s506
      $region52: #{tpu_custom_call.1} parent=47 // pred_fallthru
        _
    $region48: #{tpu_custom_call.1} parent=5 // pred_fallthru
      _
  $region6: #{tpu_custom_call.1} parent=0 // loop_footer
    %s15 = sadd.s32 1, %s11
  $region7: #{tpu_custom_call.1} parent=0 // loop_footer_branch
    %10 = sbr.rel target = $region3
  $region8: #{tpu_custom_call.1} parent=0 // loop_exit
    _

</llo_original>
